<compile_context>
chip_gen: v7x
topology: tpu7x:2x2x1
jax: 0.10.0
libtpu: 0.0.40
codegen_flags: <defaults>
</compile_context>

<pallas_src>
import functools
import math

import jax
import jax.numpy as jnp
from jax.experimental import pallas as pl
from jax.experimental.pallas import tpu as pltpu


_VMEM_LIMIT = 48 * 1024 * 1024  # explicit budget with headroom (fits v7x 64MiB)


def _pick_tile(dim, target):
    """Largest 8-aligned tile <= target that divides dim, else the full dim."""
    for cand in (target, 512, 256, 128, 64, 32, 16, 8):
        if cand <= dim and dim % cand == 0:
            return cand
    return dim


# ---------------------------------------------------------------------------
# Linear kernel:  out = x @ W + b      (W already stored as (in, out))
# ---------------------------------------------------------------------------
def _linear_kernel(x_ref, w_ref, b_ref, o_ref):
    acc = jnp.dot(x_ref[...], w_ref[...], preferred_element_type=jnp.float32)
    o_ref[...] = (acc + b_ref[...]).astype(o_ref.dtype)


def _linear(x, w, b, *, out_dtype):
    M, K = x.shape
    _, N = w.shape
    tm = _pick_tile(M, 256)
    return pl.pallas_call(
        _linear_kernel,
        out_shape=jax.ShapeDtypeStruct((M, N), out_dtype),
        grid_spec=pltpu.PrefetchScalarGridSpec(
            num_scalar_prefetch=0,
            grid=(M // tm,),
            in_specs=[
                pl.BlockSpec((tm, K), lambda i: (i, 0)),
                pl.BlockSpec((K, N), lambda i: (0, 0)),   # resident weights
                pl.BlockSpec((1, N), lambda i: (0, 0)),   # 2-D lane-dense bias
            ],
            out_specs=pl.BlockSpec((tm, N), lambda i: (i, 0)),
        ),
        compiler_params=pltpu.CompilerParams(
            dimension_semantics=("parallel",),
            vmem_limit_bytes=_VMEM_LIMIT),
    )(x, w, b)


# ---------------------------------------------------------------------------
# Flash attention kernel (per (batch, head, q_block, kv_block) grid point)
# ---------------------------------------------------------------------------
def _flash_attn_kernel(q_ref, k_ref, v_ref, o_ref, m_ref, l_ref, acc_ref,
                       *, tq, tk):
    qi = pl.program_id(2)
    ki = pl.program_id(3)

    @pl.when(ki == 0)
    def _():
        m_ref[...] = jnp.full_like(m_ref, -jnp.inf)
        l_ref[...] = jnp.zeros_like(l_ref)
        acc_ref[...] = jnp.zeros_like(acc_ref)

    q_start = qi * tq
    k_start = ki * tk

    def accumulate(apply_mask):
        q = q_ref[0, 0]            # (tq, hd) bf16  (scale pre-folded into Wq)
        k = k_ref[0, 0]            # (tk, hd) bf16
        v = v_ref[0, 0]            # (tk, hd) bf16
        # Contract over hd without materializing a transpose of k.
        s = jax.lax.dot_general(
            q, k, (((1,), (1,)), ((), ())),
            preferred_element_type=jnp.float32)          # (tq, tk) f32
        if apply_mask:
            rows = q_start + jax.lax.broadcasted_iota(jnp.int32, (tq, tk), 0)
            cols = k_start + jax.lax.broadcasted_iota(jnp.int32, (tq, tk), 1)
            s = jnp.where(cols <= rows, s, jnp.float32(-1e10))
        m_prev = m_ref[...]
        m_new = jnp.maximum(m_prev, jnp.max(s, axis=-1, keepdims=True))
        alpha = jnp.exp(m_prev - m_new)                  # f32
        p = jnp.exp(s - m_new)                           # f32 probabilities
        l_ref[...] = alpha * l_ref[...] + jnp.sum(p, axis=-1, keepdims=True)
        pv = jnp.dot(p.astype(v.dtype), v, preferred_element_type=jnp.float32)
        acc_ref[...] = alpha * acc_ref[...] + pv
        m_ref[...] = m_new

    # Block classification relative to the causal diagonal.
    is_skipped = k_start > q_start + tq - 1              # entirely above diagonal
    is_full = k_start + tk - 1 <= q_start                # entirely at/below diag
    is_diag = jnp.logical_and(jnp.logical_not(is_skipped),
                              jnp.logical_not(is_full))

    @pl.when(is_full)
    def _():
        accumulate(apply_mask=False)

    @pl.when(is_diag)
    def _():
        accumulate(apply_mask=True)

    @pl.when(ki == pl.num_programs(3) - 1)
    def _():
        o_ref[0, 0] = (acc_ref[...] *
                       pl.reciprocal(l_ref[...], approx=True)).astype(o_ref.dtype)


def _flash_attention(q, k, v):
    """q, k, v: (B, H, T, hd) bf16 -> (B, H, T, hd) bf16."""
    B, H, T, hd = q.shape
    tq = _pick_tile(T, 128)
    tk = tq  # equal q/kv tiles keep diagonal-block logic simple
    n_kv = T // tk

    def q_map(b, h, qi, ki):
        return (b, h, qi, 0)

    def kv_map(b, h, qi, ki):
        # Blocks strictly above the diagonal are never used; clamp the index so
        # their DMA re-uses the previously fetched block (no extra HBM traffic).
        last_needed = ((qi + 1) * tq - 1) // tk
        return (b, h, jnp.minimum(ki, last_needed), 0)

    kernel = functools.partial(_flash_attn_kernel, tq=tq, tk=tk)
    return pl.pallas_call(
        kernel,
        out_shape=jax.ShapeDtypeStruct((B, H, T, hd), q.dtype),
        grid_spec=pltpu.PrefetchScalarGridSpec(
            num_scalar_prefetch=0,
            grid=(B, H, T // tq, n_kv),
            in_specs=[
                pl.BlockSpec((1, 1, tq, hd), q_map),
                pl.BlockSpec((1, 1, tk, hd), kv_map),
                pl.BlockSpec((1, 1, tk, hd), kv_map),
            ],
            out_specs=pl.BlockSpec((1, 1, tq, hd), q_map),
            scratch_shapes=[
                pltpu.VMEM((tq, 1), jnp.float32),    # running max
                pltpu.VMEM((tq, 1), jnp.float32),    # running denom
                pltpu.VMEM((tq, hd), jnp.float32),   # running output acc
            ],
        ),
        compiler_params=pltpu.CompilerParams(
            dimension_semantics=("parallel", "parallel", "parallel", "arbitrary"),
            vmem_limit_bytes=_VMEM_LIMIT),
    )(q, k, v)


# ---------------------------------------------------------------------------
# Full module forward
# ---------------------------------------------------------------------------
def causal_self_attention(x, params, n_head):
    """x: (B, T, C) float32.  params: dict of nn.Linear-layout weights/biases."""
    B, T, C = x.shape
    assert C % n_head == 0
    hd = C // n_head
    scale = 1.0 / math.sqrt(hd)

    # Host-side weight prep (layout plumbing, runs once outside the kernels):
    # fold 1/sqrt(hd) into Wq/bq, fuse QKV, pre-transpose to (in, out), cast bf16.
    wq = params["wq"] * scale
    bq = params["bq"] * scale
    w_qkv = jnp.concatenate([wq, params["wk"], params["wv"]], axis=0)  # (3C, C)
    w_qkv = w_qkv.T.astype(jnp.bfloat16)                               # (C, 3C)
    b_qkv = jnp.concatenate([bq, params["bk"], params["bv"]]).reshape(1, 3 * C)
    w_p = params["wp"].T.astype(jnp.bfloat16)                          # (C, C)
    b_p = params["bp"].reshape(1, C)

    # Stage 1: fused QKV projection.
    x2 = x.reshape(B * T, C).astype(jnp.bfloat16)
    qkv = _linear(x2, w_qkv, b_qkv, out_dtype=jnp.bfloat16)            # (B*T, 3C)

    # Split heads: (3, B, H, T, hd).
    qkv = qkv.reshape(B, T, 3, n_head, hd).transpose(2, 0, 3, 1, 4)
    q, k, v = qkv[0], qkv[1], qkv[2]

    # Stage 2: flash attention with online softmax.
    y = _flash_attention(q, k, v)                                      # (B, H, T, hd)

    # Merge heads and project.
    y = y.transpose(0, 2, 1, 3).reshape(B * T, C)
    out = _linear(y, w_p, b_p, out_dtype=x.dtype)                      # (B*T, C)
    return out.reshape(B, T, C)


def _reference(x, params, n_head):
    """Pure-JAX f32 reference mirroring the PyTorch forward (eval mode)."""
    B, T, C = x.shape
    hd = C // n_head

    def lin(x, w, b):
        return x @ w.T + b

    q = lin(x, params["wq"], params["bq"]).reshape(B, T, n_head, hd).transpose(0, 2, 1, 3)
    k = lin(x, params["wk"], params["bk"]).reshape(B, T, n_head, hd).transpose(0, 2, 1, 3)
    v = lin(x, params["wv"], params["bv"]).reshape(B, T, n_head, hd).transpose(0, 2, 1, 3)
    att = (q @ k.transpose(0, 1, 3, 2)) * (1.0 / math.sqrt(hd))
    mask = jnp.tril(jnp.ones((T, T), dtype=bool))[None, None]
    att = jnp.where(mask, att, -1e10)
    att = jax.nn.softmax(att, axis=-1)
    y = (att @ v).transpose(0, 2, 1, 3).reshape(B, T, C)
    return lin(y, params["wp"], params["bp"])


if __name__ == "__main__":
    # Small config consistent with the module: B=2, T(seq)=8, C(n_embd)=32, n_head=4.
    B, T, C, n_head = 2, 8, 32, 4

    key = jax.random.PRNGKey(0)
    keys = jax.random.split(key, 9)
    scale = 1.0 / math.sqrt(C)
    params = {
        "wq": jax.random.normal(keys[0], (C, C), jnp.float32) * scale,
        "bq": jax.random.normal(keys[1], (C,), jnp.float32) * 0.02,
        "wk": jax.random.normal(keys[2], (C, C), jnp.float32) * scale,
        "bk": jax.random.normal(keys[3], (C,), jnp.float32) * 0.02,
        "wv": jax.random.normal(keys[4], (C, C), jnp.float32) * scale,
        "bv": jax.random.normal(keys[5], (C,), jnp.float32) * 0.02,
        "wp": jax.random.normal(keys[6], (C, C), jnp.float32) * scale,
        "bp": jax.random.normal(keys[7], (C,), jnp.float32) * 0.02,
    }
    x = jax.random.normal(keys[8], (B, T, C), jnp.float32)

    out = causal_self_attention(x, params, n_head)
    out = jax.block_until_ready(out)

    ref = _reference(x, params, n_head)
    assert out.shape == (B, T, C)
    # bf16 MXU operands + approx reciprocal => loosened tolerance vs f32 reference.
    assert jnp.allclose(out, ref, atol=5e-2, rtol=5e-2), "mismatch vs reference"

    print("KERNEL_OK")
</pallas_src>

<mosaic_0001>
module attributes {stable_mosaic.version = 11 : i64} {
  func.func @_linear_kernel(%arg0: i32, %arg1: memref<16x32xbf16, #tpu.memory_space<vmem>>, %arg2: memref<32x96xbf16, #tpu.memory_space<vmem>>, %arg3: memref<1x96xf32, #tpu.memory_space<vmem>>, %arg4: memref<16x96xbf16, #tpu.memory_space<vmem>>) attributes {dimension_semantics = [#tpu.dimension_semantics<parallel>], iteration_bounds = array<i64: 1>, scalar_prefetch = 0 : i64, scratch_operands = 0 : i64, tpu.core_type = #tpu.core_type<tc>, window_params = [{transform_indices = @transform_0, window_bounds = array<i64: 16, 32>}, {pipeline_mode = #tpu.pipeline_mode<synchronous>, transform_indices = @transform_1, window_bounds = array<i64: 32, 96>}, {pipeline_mode = #tpu.pipeline_mode<synchronous>, transform_indices = @transform_2, window_bounds = array<i64: 1, 96>}, {transform_indices = @transform_3, window_bounds = array<i64: 16, 96>}]} {
    %c0 = arith.constant 0 : index
    %c0_0 = arith.constant 0 : index
    %0 = vector.load %arg1[%c0, %c0_0] : memref<16x32xbf16, #tpu.memory_space<vmem>>, vector<16x32xbf16>
    %c0_1 = arith.constant 0 : index
    %c0_2 = arith.constant 0 : index
    %1 = vector.load %arg2[%c0_1, %c0_2] : memref<32x96xbf16, #tpu.memory_space<vmem>>, vector<32x96xbf16>
    %cst = arith.constant dense<0.000000e+00> : vector<16x96xf32>
    %2 = tpu.matmul %0, %1, %cst {dimension_numbers = #tpu.dot_dimension_numbers<[1], [0], [0], [1], [0, 0, 1, 1], [], []>} : vector<16x32xbf16>, vector<32x96xbf16>, vector<16x96xf32> -> vector<16x96xf32>
    %c0_3 = arith.constant 0 : index
    %c0_4 = arith.constant 0 : index
    %3 = vector.load %arg3[%c0_3, %c0_4] : memref<1x96xf32, #tpu.memory_space<vmem>>, vector<1x96xf32>
    %4 = vector.broadcast %3 : vector<1x96xf32> to vector<16x96xf32>
    %5 = arith.addf %2, %4 : vector<16x96xf32>
    %6 = arith.truncf %5 : vector<16x96xf32> to vector<16x96xbf16>
    %c0_5 = arith.constant 0 : index
    %c0_6 = arith.constant 0 : index
    %7 = vector.load %arg4[%c0_5, %c0_6] : memref<16x96xbf16, #tpu.memory_space<vmem>>, vector<16x96xbf16>
    tpu.vector_store %arg4[%c0_5, %c0_6], %6 {strides = array<i32>} : memref<16x96xbf16, #tpu.memory_space<vmem>>, vector<16x96xbf16>,
    return
  }
  func.func @transform_0(%arg0: i32) -> (i32, i32) {
    %c0_i32 = arith.constant 0 : i32
    %c0_i32_0 = arith.constant 0 : i32
    return %arg0, %c0_i32 : i32, i32
  }
  func.func @transform_1(%arg0: i32) -> (i32, i32) {
    %c0_i32 = arith.constant 0 : i32
    %c0_i32_0 = arith.constant 0 : i32
    %c0_i32_1 = arith.constant 0 : i32
    return %c0_i32, %c0_i32_0 : i32, i32
  }
  func.func @transform_2(%arg0: i32) -> (i32, i32) {
    %c0_i32 = arith.constant 0 : i32
    %c0_i32_0 = arith.constant 0 : i32
    %c0_i32_1 = arith.constant 0 : i32
    return %c0_i32, %c0_i32_0 : i32, i32
  }
  func.func @transform_3(%arg0: i32) -> (i32, i32) {
    %c0_i32 = arith.constant 0 : i32
    %c0_i32_0 = arith.constant 0 : i32
    return %arg0, %c0_i32 : i32, i32
  }
}

</mosaic_0001>

<llo_original>
// kernel: tpu_custom_call.1
$region0: #{tpu_custom_call.1}
  #allocation0 [shape = 'u32[]', space=smem, size = 0x4, offset = 0x4, fixed_abs, tag = 'smem constant byte address 0x4 - core index']
  #allocation1 [shape = 'u32[144,128]{1,0:T(1,128)}', space=vmem, size = 0x12000, scoped, tag = 'internal scratch']
  %s0 = inlined_call_operand.hbm [shape: bf16[16,32], index: 0, kind: input, shape index: {}]
  %s1 = inlined_call_operand.hbm [shape: bf16[32,96], index: 1, kind: input, shape index: {}]
  %s2 = inlined_call_operand.vmem [shape: f32[1,96], index: 2, kind: input, shape index: {}]
  %s3 = inlined_call_operand.hbm [shape: bf16[16,96], index: 3, kind: output, shape index: {}]
  %s4 = sld [smem:[#allocation0]]
  $region30: #{tpu_custom_call.1} parent=0
    _
  %s6 = ssub.s32 1, %s4
  %s7 = scalar_select 0, %s6, %s4
  $region1: #{tpu_custom_call.1} parent=0
    #allocation2 [shape = 'u8[4096]{0}', space=vmem, size = 0x1000, scoped, tag = 'input window, operand 0, single buffered']
    #allocation3 [shape = 's32[1]{0}', space=sflag, size = 0x4, scoped, tag = 'scoped memory for tpu_custom_call.1']
    #allocation4 [shape = 's32[1]{0}', space=sflag, size = 0x4, scoped, tag = 'scoped memory for tpu_custom_call.1']
    #allocation5 [shape = 'u8[8192]{0}', space=vmem, size = 0x2000, scoped, tag = 'input window, operand 1, single buffered']
    #allocation6 [shape = 's32[1]{0}', space=sflag, size = 0x4, scoped, tag = 'scoped memory for tpu_custom_call.1']
    #allocation7 [shape = 'u8[4096]{0}', space=vmem, size = 0x1000, scoped, tag = 'output window, operand 0, single buffered']
    %8 = vsyncpa [#allocation3], 0
    %9 = vsyncpa [#allocation6], 0
    %10 = vsyncpa [#allocation4], 0
    // Predicated region
    $region2: #{tpu_custom_call.1} parent=1 // pred_check
      _
    $region3: #{tpu_custom_call.1} parent=1 // pred_check_branch
      %12 = sbr.rel (0) target = $region5
    $region4: #{tpu_custom_call.1} parent=1 // pred_region
      %s14 = ssub.s32 128, 128
      %15 = vsyncadd [#allocation3], %s14
      %s16 = sshll.u32 [#allocation2], 4
      %s17 = int_to_ptr.vmem [resolvable:$true] %s16
      %22 = dma.hbm_to_vmem [thread:$0]  %s0, 128, %s17, [#allocation3], 64, 64, 4
    $region5: #{tpu_custom_call.1} parent=1 // pred_fallthru
      _
    // Predicated region
    $region6: #{tpu_custom_call.1} parent=1 // pred_check
      _
    $region7: #{tpu_custom_call.1} parent=1 // pred_check_branch
      %24 = sbr.rel (0) target = $region9
    $region8: #{tpu_custom_call.1} parent=1 // pred_region
      %s26 = ssub.s32 256, 256
      %27 = vsyncadd [#allocation6], %s26
      %s28 = sshll.u32 [#allocation5], 4
      %s29 = int_to_ptr.vmem [resolvable:$true] %s28
      %34 = dma.hbm_to_vmem [thread:$0]  %s1, 256, %s29, [#allocation6], 64, 64, 4
    $region9: #{tpu_custom_call.1} parent=1 // pred_fallthru
      _
    // Predicated region
    $region10: #{tpu_custom_call.1} parent=1 // pred_check
      _
    $region11: #{tpu_custom_call.1} parent=1 // pred_check_branch
      %36 = sbr.rel (0) target = $region13
    $region12: #{tpu_custom_call.1} parent=1 // pred_region
      _
    $region13: #{tpu_custom_call.1} parent=1 // pred_fallthru
      _
    // Predicated region
    $region14: #{tpu_custom_call.1} parent=1 // pred_check
      _
    $region15: #{tpu_custom_call.1} parent=1 // pred_check_branch
      %38 = sbr.rel (0) target = $region17
    $region16: #{tpu_custom_call.1} parent=1 // pred_region
      %39 = dma.done [#allocation3], 128
    $region17: #{tpu_custom_call.1} parent=1 // pred_fallthru
      _
    // Predicated region
    $region18: #{tpu_custom_call.1} parent=1 // pred_check
      _
    $region19: #{tpu_custom_call.1} parent=1 // pred_check_branch
      %41 = sbr.rel (0) target = $region21
    $region20: #{tpu_custom_call.1} parent=1 // pred_region
      %42 = dma.done [#allocation6], 256
    $region21: #{tpu_custom_call.1} parent=1 // pred_fallthru
      _
    %v44 = vld [vmem:[#allocation2] sm:$0xf]
    %v45 = vld [vmem:[#allocation2 + $0x4] sm:$0xf]
    %v46 = vld [vmem:[#allocation5] sm:$0xf]
    %v47 = vld [vmem:[#allocation5 + $0x4] sm:$0xf]
    %v48 = vld [vmem:[#allocation5 + $0x8] sm:$0xf]
    %v49 = vld [vmem:[#allocation5 + $0xc] sm:$0xf]
    %v50 = vld [vmem:[%s2] sm:$0x1]
    %v52 = vlaneseq
    %v53 = vshrl.u32 %v52, 7
    %v54 = vsub.s32 0, %v53
    %v55 = vrot.slane %v50, %v54
    %v59 = vunpack.c.l.b16 %v44
    %v60 = vunpack.c.l.b16 %v45
    %v61 = vpack.c.b16 %v60, %v59
    %v66 = vunpack.c.l.b16 %v46
    %v67 = vunpack.c.l.b16 %v47
    %v68 = vunpack.c.l.b16 %v48
    %v69 = vunpack.c.l.b16 %v49
    %v70 = vpack.c.b16 %v67, %v66
    %v71 = vpack.c.b16 %v69, %v68
    %vm74 = vcmask 261120
    %v76 = vsel %vm74, %v61, 0
    %78 = vmatprep.subr.bf16.mxu0 0
    %79 = vmatpush1.bf16.msra.mxu0 %v70
    %80 = vmatprep.subr.bf16.mxu0 0
    %81 = vmatpush1.bf16.msra.mxu0 %v71
    %82 = vmatprep.subr.bf16.mxu0 0
    %83 = vmatpush1.bf16.msra.mxu0 0
    %84 = vmatprep.subr.bf16.mxu0 0
    %85 = vmatpush1.bf16.msra.mxu0 0
    %86 = vmatprep.subr.bf16.mxu0 0
    %87 = vmatpush1.bf16.msra.mxu0 0
    %88 = vmatprep.subr.bf16.mxu0 0
    %89 = vmatpush1.bf16.msra.mxu0 0
    %90 = vmatprep.subr.bf16.mxu0 0
    %91 = vmatpush1.bf16.msra.mxu0 0
    %92 = vmatprep.subr.bf16.mxu0 0
    %93 = vmatpush1.bf16.msra.mxu0 0
    %94 = vmatprep.subr.bf16.mxu0 0
    %95 = vmatpush1.bf16.msra.mxu0 0
    %96 = vmatprep.subr.bf16.mxu0 0
    %97 = vmatpush1.bf16.msra.mxu0 0
    %98 = vmatprep.subr.bf16.mxu0 0
    %99 = vmatpush1.bf16.msra.mxu0 0
    %100 = vmatprep.subr.bf16.mxu0 0
    %101 = vmatpush1.bf16.msra.mxu0 0
    %102 = vmatprep.subr.bf16.mxu0 0
    %103 = vmatpush1.bf16.msra.mxu0 0
    %104 = vmatprep.subr.bf16.mxu0 0
    %105 = vmatpush1.bf16.msra.mxu0 0
    %106 = vmatprep.subr.bf16.mxu0 0
    %107 = vmatpush1.bf16.msra.mxu0 0
    %108 = vmatprep.subr.bf16.mxu0 0
    %109 = vmatpush1.bf16.msra.mxu0 0
    %110 = vmatprep.mubr.bf16.mxu0 0
    %111 = vmatmul.mubr.bf16.gmra.mrb[0].mxu0 %v76
    %v112 = vpop.f32.mrb[0].mxu0
    %v113 = vadd.f32 %v55, %v112
    %v114 = vpop.f32.mrb[0].mxu0
    %v115 = vpop.f32.mrb[0].mxu0
    %v116 = vadd.f32 %v55, %v115
    %v117 = vpop.f32.mrb[0].mxu0
    %118 = vdwg.mxu0
    %v119 = vpack.c.bf16 %v116, %v113
    %v121 = vunpack.c.l.b16 %v119
    %v122 = vunpack.c.h.b16 %v119
    %v123 = vpack.c.b16 %v121, %v121
    %v124 = vpack.c.b16 %v122, %v122
    %vm127 = vcmask 781312
    %128 = vst.msk [vmem:[#allocation7] sm:$0xf] %vm127, %v123
    %129 = vst.msk [vmem:[#allocation7 + $0x4] sm:$0xf] %vm127, %v124
    // Predicated region
    $region22: #{tpu_custom_call.1} parent=1 // pred_check
      _
    $region23: #{tpu_custom_call.1} parent=1 // pred_check_branch
      %131 = sbr.rel (0) target = $region25
    $region24: #{tpu_custom_call.1} parent=1 // pred_region
      %s133 = ssub.s32 128, 128
      %134 = vsyncadd [#allocation4], %s133
      %s135 = sshll.u32 [#allocation7], 4
      %s136 = int_to_ptr.vmem [resolvable:$true] %s135
      %141 = dma.vmem_to_hbm [thread:$0]  %s136, 128, %s3, [#allocation4], 64, 64, 4
    $region25: #{tpu_custom_call.1} parent=1 // pred_fallthru
      _
    // Predicated region
    $region26: #{tpu_custom_call.1} parent=1 // pred_check
      _
    $region27: #{tpu_custom_call.1} parent=1 // pred_check_branch
      %143 = sbr.rel (0) target = $region29
    $region28: #{tpu_custom_call.1} parent=1 // pred_region
      %144 = dma.done [#allocation4], 128
    $region29: #{tpu_custom_call.1} parent=1 // pred_fallthru
      _
    %145 = vsyncpa [#allocation3], 1
    %146 = vsyncpa [#allocation6], 1
    %147 = vsyncpa [#allocation4], 1

</llo_original>
